<compile_context>
chip_gen: v7x
topology: tpu7x:2x2x1
jax: 0.10.0
libtpu: 0.0.40
codegen_flags: <defaults>
</compile_context>

<pallas_src>
import functools

import jax
import jax.numpy as jnp
from jax import lax
from jax.experimental import pallas as pl
from jax.experimental.pallas import tpu as pltpu


# ----------------------------------------------------------------------------
# Kernel
# ----------------------------------------------------------------------------
def ppo_fused_kernel(x_ref, w1_ref, b1_ref, w2t_ref, b2t_ref, out_ref, *,
                     num_actions):
    # x    : (TB, D)         input dtype (f32) -- cast to bf16 here (saves a host pass)
    # w1   : (D, 2H)         bf16   [actor_w1 | critic_w1]
    # b1   : (1, 2H)         f32
    # w2t  : (ROWS, 2H)      bf16   rows [0,A)=actor_w2^T, row A=critic_w2^T, rest 0
    # b2t  : (ROWS, 1)       f32
    # out  : (ROWS, TB)      f32    batch on lanes; rows [0,A)=probs, row A=value

    xb = x_ref[...].astype(jnp.bfloat16)

    # Fused first layer (both heads at once) on the MXU, f32 accumulation.
    h = jnp.dot(xb, w1_ref[...], preferred_element_type=jnp.float32)
    h = jnp.maximum(h + b1_ref[...], 0.0)                       # (TB, 2H) f32

    # Fused second layer with the output already transposed (batch -> lanes):
    #   yt[o, b] = sum_k w2t[o, k] * h[b, k]     (NT / q.k^T-style MXU matmul)
    yt = lax.dot_general(
        w2t_ref[...], h.astype(jnp.bfloat16),
        dimension_numbers=(((1,), (1,)), ((), ())),
        preferred_element_type=jnp.float32)                     # (ROWS, TB) f32
    yt = yt + b2t_ref[...]

    rows, tb = yt.shape
    row = lax.broadcasted_iota(jnp.int32, (rows, tb), 0)
    is_logit = row < num_actions

    # Per-batch-element (per-lane) numerically-stable softmax over the first
    # `num_actions` rows; reductions run along the sublane axis (XLU slot).
    logits = jnp.where(is_logit, yt, -1e30)
    m = jnp.max(logits, axis=0, keepdims=True)                  # (1, TB)
    e = jnp.exp(logits - m)                                     # 0 on masked rows
    denom = jnp.sum(e, axis=0, keepdims=True)                   # (1, TB)
    probs = e * pl.reciprocal(denom, approx=False)              # exact (PPO ratios)

    # Single lane-dense store: 16 f32 sublanes per batch element (~8x less
    # writeback than a 128-lane f32 slab).
    out_ref[...] = jnp.where(row == num_actions, yt, probs)


# ----------------------------------------------------------------------------
# Host-side packing (call ONCE, outside the rollout loop) + wrapper
# ----------------------------------------------------------------------------
def _round_up(n, m):
    return ((n + m - 1) // m) * m


def pack_params(params):
    """Fuse actor/critic weights into packed, MXU-friendly bf16 operands.

    Hoisted out of the forward: call once and reuse across rollout steps.
    """
    aw1, ab1 = params["aw1"], params["ab1"]   # (D,H), (1,H)
    aw2, ab2 = params["aw2"], params["ab2"]   # (H,A), (1,A)
    cw1, cb1 = params["cw1"], params["cb1"]   # (D,H), (1,H)
    cw2, cb2 = params["cw2"], params["cb2"]   # (H,1), (1,1)
    D, H = aw1.shape
    A = aw2.shape[1]
    out_rows = max(8, _round_up(A + 1, 8))    # sublane-aligned transposed output

    w1p = jnp.concatenate([aw1, cw1], axis=1).astype(jnp.bfloat16)   # (D, 2H)
    b1p = jnp.concatenate([ab1, cb1], axis=1).astype(jnp.float32)    # (1, 2H)

    # Second layers packed block-diagonally, stored TRANSPOSED: rows are output
    # channels (A prob rows + 1 value row), columns are the 2H hidden units.
    w2t = jnp.zeros((out_rows, 2 * H), jnp.float32)
    w2t = w2t.at[:A, :H].set(aw2.T)            # actor head rows
    w2t = w2t.at[A, H:].set(cw2[:, 0])         # critic head row
    w2t = w2t.astype(jnp.bfloat16)                                   # (ROWS, 2H)

    b2t = jnp.zeros((out_rows, 1), jnp.float32)
    b2t = b2t.at[:A, 0].set(ab2[0])
    b2t = b2t.at[A, 0].set(cb2[0, 0])                                # (ROWS, 1)

    return dict(w1p=w1p, b1p=b1p, w2t=w2t, b2t=b2t,
                A=A, out_rows=out_rows, D=D, H=H)


def _choose_tile(B, tile_b):
    """Lane-aligned batch tile (multiple of 128) with small padding waste.

    Prefers >= 2 grid steps (so v7x's two TensorCores both participate) when
    that does not add any padding.
    """
    b128 = max(128, _round_up(B, 128))
    tb = max(128, min((tile_b // 128) * 128, b128))

    def waste(t):
        return _round_up(B, t) - B

    # Keep host-side padding waste modest relative to B.
    while tb > 128 and waste(tb) > max(128, B // 8):
        tb -= 128
    # Prefer >= 2 grid steps if it costs no extra padding (v7x dual-TC sharding).
    if _round_up(B, tb) // tb < 2:
        half = max(128, ((tb // 2) // 128) * 128)
        if half < tb and waste(half) <= waste(tb):
            tb = half
    return tb


def ppo_policy_forward(x, packed, *, tile_b=512):
    """Fused actor+critic forward. Returns (action_probs (B,A), value (B,1)).

    `packed` must come from pack_params(params) (pack once, reuse).
    """
    # TODO(synk): re-sweep tile_b (512-1024) per chip generation with production
    # rollout batch sizes; 512 keeps >=2 grid steps sooner on v7x.
    A, out_rows = packed["A"], packed["out_rows"]
    B, D = x.shape
    H2 = packed["w1p"].shape[1]

    tb = _choose_tile(B, tile_b)
    Bp = _round_up(B, tb)
    if Bp != B:                       # only pad when B does not divide the tile
        x = jnp.pad(x, ((0, Bp - B), (0, 0)))

    kernel = functools.partial(ppo_fused_kernel, num_actions=A)

    def resident(shape):
        # weights/biases: constant index_map -> DMA'd once, stay resident in VMEM
        return pl.BlockSpec(shape, lambda i: (0, 0))

    flops = 2 * Bp * D * H2 + 2 * Bp * H2 * out_rows
    bytes_accessed = (Bp * D * x.dtype.itemsize
                      + packed["w1p"].size * 2 + packed["b1p"].size * 4
                      + packed["w2t"].size * 2 + packed["b2t"].size * 4
                      + out_rows * Bp * 4)
    cost = pl.CostEstimate(flops=flops,
                           transcendentals=Bp * out_rows,
                           bytes_accessed=bytes_accessed)

    out = pl.pallas_call(
        kernel,
        out_shape=jax.ShapeDtypeStruct((out_rows, Bp), jnp.float32),
        grid_spec=pltpu.PrefetchScalarGridSpec(
            num_scalar_prefetch=0,
            grid=(Bp // tb,),
            in_specs=[
                pl.BlockSpec((tb, D), lambda i: (i, 0)),       # x tile (pipelined)
                resident(packed["w1p"].shape),
                resident(packed["b1p"].shape),
                resident(packed["w2t"].shape),
                resident(packed["b2t"].shape),
            ],
            out_specs=pl.BlockSpec((out_rows, tb), lambda i: (0, i)),
        ),
        compiler_params=pltpu.CompilerParams(
            dimension_semantics=("parallel",),        # shard batch across v7x TCs
            vmem_limit_bytes=32 * 1024 * 1024,
        ),
        cost_estimate=cost,
    )(x, packed["w1p"], packed["b1p"], packed["w2t"], packed["b2t"])

    probs = out[:A, :B].T            # (B, A)   -- tiny host-side transpose
    value = out[A:A + 1, :B].T       # (B, 1)
    return probs, value


# ----------------------------------------------------------------------------
# Parameters + references
# ----------------------------------------------------------------------------
def init_params(key, input_dim, output_dim, hidden_dim=128):
    """Deterministic synthetic params (PyTorch Linear init, stored transposed)."""
    ks = jax.random.split(key, 8)

    def lin(kw, kb, fan_in, fan_out):
        bound = 1.0 / jnp.sqrt(fan_in)
        w = jax.random.uniform(kw, (fan_in, fan_out), jnp.float32, -bound, bound)
        b = jax.random.uniform(kb, (1, fan_out), jnp.float32, -bound, bound)
        return w, b

    aw1, ab1 = lin(ks[0], ks[1], input_dim, hidden_dim)
    aw2, ab2 = lin(ks[2], ks[3], hidden_dim, output_dim)
    cw1, cb1 = lin(ks[4], ks[5], input_dim, hidden_dim)
    cw2, cb2 = lin(ks[6], ks[7], hidden_dim, 1)
    return dict(aw1=aw1, ab1=ab1, aw2=aw2, ab2=ab2,
                cw1=cw1, cb1=cb1, cw2=cw2, cb2=cb2)


def reference_forward_bf16(x, p):
    """Pure-JAX reference using the same bf16 MXU operands as the kernel."""
    bf = jnp.bfloat16
    xb = x.astype(bf)
    h_a = jnp.maximum(
        jnp.dot(xb, p["aw1"].astype(bf), preferred_element_type=jnp.float32)
        + p["ab1"], 0.0)
    logits = jnp.dot(h_a.astype(bf), p["aw2"].astype(bf),
                     preferred_element_type=jnp.float32) + p["ab2"]
    probs = jax.nn.softmax(logits, axis=-1)
    h_c = jnp.maximum(
        jnp.dot(xb, p["cw1"].astype(bf), preferred_element_type=jnp.float32)
        + p["cb1"], 0.0)
    value = jnp.dot(h_c.astype(bf), p["cw2"].astype(bf),
                    preferred_element_type=jnp.float32) + p["cb2"]
    return probs, value


def reference_forward_f32(x, p):
    h_a = jnp.maximum(x @ p["aw1"] + p["ab1"], 0.0)
    probs = jax.nn.softmax(h_a @ p["aw2"] + p["ab2"], axis=-1)
    h_c = jnp.maximum(x @ p["cw1"] + p["cb1"], 0.0)
    value = h_c @ p["cw2"] + p["cb2"]
    return probs, value


# ----------------------------------------------------------------------------
if __name__ == "__main__":
    key = jax.random.PRNGKey(0)
    k_param, k_x = jax.random.split(key)

    B, input_dim, output_dim, hidden_dim = 8, 32, 8, 128
    params = init_params(k_param, input_dim, output_dim, hidden_dim)
    x = jax.random.normal(k_x, (B, input_dim), jnp.float32)

    # Pack / cast weights ONCE (hoisted out of the forward); jit the forward so
    # rollout-loop calls are a single compiled executable.
    packed = pack_params(params)
    fwd = jax.jit(lambda xb: ppo_policy_forward(xb, packed))

    probs, value = fwd(x)
    jax.block_until_ready((probs, value))

    assert probs.shape == (B, output_dim) and value.shape == (B, 1)

    # Tight check vs a reference using identical bf16 MXU operands.
    ref_probs, ref_value = reference_forward_bf16(x, params)
    assert jnp.allclose(probs, ref_probs, atol=1e-2, rtol=1e-2)
    assert jnp.allclose(value, ref_value, atol=1e-2, rtol=1e-2)

    # Loose sanity check vs the full-f32 PyTorch-equivalent math.
    f32_probs, f32_value = reference_forward_f32(x, params)
    assert jnp.allclose(probs, f32_probs, atol=5e-2, rtol=5e-2)
    assert jnp.allclose(value, f32_value, atol=5e-2, rtol=5e-2)

    assert jnp.allclose(jnp.sum(probs, axis=-1), 1.0, atol=1e-2)

    print("KERNEL_OK")
</pallas_src>

<mosaic_0001>
module attributes {stable_mosaic.version = 11 : i64} {
  func.func @ppo_fused_kernel(%arg0: i32, %arg1: memref<128x32xf32, #tpu.memory_space<vmem>>, %arg2: memref<32x256xbf16, #tpu.memory_space<vmem>>, %arg3: memref<1x256xf32, #tpu.memory_space<vmem>>, %arg4: memref<16x256xbf16, #tpu.memory_space<vmem>>, %arg5: memref<16x1xf32, #tpu.memory_space<vmem>>, %arg6: memref<16x128xf32, #tpu.memory_space<vmem>>) attributes {dimension_semantics = [#tpu.dimension_semantics<parallel>], iteration_bounds = array<i64: 1>, scalar_prefetch = 0 : i64, scratch_operands = 0 : i64, tpu.core_type = #tpu.core_type<tc>, window_params = [{transform_indices = @transform_0, window_bounds = array<i64: 128, 32>}, {pipeline_mode = #tpu.pipeline_mode<synchronous>, transform_indices = @transform_1, window_bounds = array<i64: 32, 256>}, {pipeline_mode = #tpu.pipeline_mode<synchronous>, transform_indices = @transform_2, window_bounds = array<i64: 1, 256>}, {pipeline_mode = #tpu.pipeline_mode<synchronous>, transform_indices = @transform_3, window_bounds = array<i64: 16, 256>}, {pipeline_mode = #tpu.pipeline_mode<synchronous>, transform_indices = @transform_4, window_bounds = array<i64: 16, 1>}, {transform_indices = @transform_5, window_bounds = array<i64: 16, 128>}]} {
    %c0 = arith.constant 0 : index
    %c0_0 = arith.constant 0 : index
    %0 = vector.load %arg1[%c0, %c0_0] : memref<128x32xf32, #tpu.memory_space<vmem>>, vector<128x32xf32>
    %1 = arith.truncf %0 : vector<128x32xf32> to vector<128x32xbf16>
    %c0_1 = arith.constant 0 : index
    %c0_2 = arith.constant 0 : index
    %2 = vector.load %arg2[%c0_1, %c0_2] : memref<32x256xbf16, #tpu.memory_space<vmem>>, vector<32x256xbf16>
    %cst = arith.constant dense<0.000000e+00> : vector<128x256xf32>
    %3 = tpu.matmul %1, %2, %cst {dimension_numbers = #tpu.dot_dimension_numbers<[1], [0], [0], [1], [0, 0, 1, 1], [], []>} : vector<128x32xbf16>, vector<32x256xbf16>, vector<128x256xf32> -> vector<128x256xf32>
    %c0_3 = arith.constant 0 : index
    %c0_4 = arith.constant 0 : index
    %4 = vector.load %arg3[%c0_3, %c0_4] : memref<1x256xf32, #tpu.memory_space<vmem>>, vector<1x256xf32>
    %5 = vector.broadcast %4 : vector<1x256xf32> to vector<128x256xf32>
    %6 = arith.addf %3, %5 : vector<128x256xf32>
    %cst_5 = arith.constant 0.000000e+00 : f32
    %7 = vector.broadcast %cst_5 : f32 to vector<128x256xf32>
    %8 = arith.maximumf %6, %7 : vector<128x256xf32>
    %c0_6 = arith.constant 0 : index
    %c0_7 = arith.constant 0 : index
    %9 = vector.load %arg4[%c0_6, %c0_7] : memref<16x256xbf16, #tpu.memory_space<vmem>>, vector<16x256xbf16>
    %10 = arith.truncf %8 : vector<128x256xf32> to vector<128x256xbf16>
    %cst_8 = arith.constant dense<0.000000e+00> : vector<16x128xf32>
    %11 = tpu.matmul %9, %10, %cst_8 {dimension_numbers = #tpu.dot_dimension_numbers<[1], [1], [0], [0], [0, 0, 1, 0], [], []>} : vector<16x256xbf16>, vector<128x256xbf16>, vector<16x128xf32> -> vector<16x128xf32>
    %c0_9 = arith.constant 0 : index
    %c0_10 = arith.constant 0 : index
    %12 = vector.load %arg5[%c0_9, %c0_10] : memref<16x1xf32, #tpu.memory_space<vmem>>, vector<16x1xf32>
    %13 = vector.broadcast %12 : vector<16x1xf32> to vector<16x128xf32>
    %14 = arith.addf %11, %13 : vector<16x128xf32>
    %15 = tpu.iota {dimensions = array<i32: 0>} : vector<16x128xi32>
    %c8_i32 = arith.constant 8 : i32
    %16 = vector.broadcast %c8_i32 : i32 to vector<16x128xi32>
    %17 = arith.cmpi slt, %15, %16 : vector<16x128xi32>
    %cst_11 = arith.constant -1.000000e+30 : f32
    %18 = vector.broadcast %cst_11 : f32 to vector<16x128xf32>
    %19 = arith.select %17, %14, %18 : vector<16x128xi1>, vector<16x128xf32>
    %cst_12 = arith.constant dense<0xFF800000> : vector<128xf32>
    %20 = vector.multi_reduction <maximumf>, %19, %cst_12 [0] : vector<16x128xf32> to vector<128xf32>
    %21 = vector.shape_cast %20 : vector<128xf32> to vector<1x128xf32>
    %22 = vector.broadcast %21 : vector<1x128xf32> to vector<16x128xf32>
    %23 = arith.subf %19, %22 : vector<16x128xf32>
    %24 = math.exp %23 : vector<16x128xf32>
    %cst_13 = arith.constant dense<0.000000e+00> : vector<128xf32>
    %25 = vector.multi_reduction <add>, %24, %cst_13 [0] : vector<16x128xf32> to vector<128xf32>
    %26 = vector.shape_cast %25 : vector<128xf32> to vector<1x128xf32>
    %27 = tpu.reciprocal %26 : vector<1x128xf32> -> vector<1x128xf32>
    %28 = vector.broadcast %27 : vector<1x128xf32> to vector<16x128xf32>
    %29 = arith.mulf %24, %28 : vector<16x128xf32>
    %c8_i32_14 = arith.constant 8 : i32
    %30 = vector.broadcast %c8_i32_14 : i32 to vector<16x128xi32>
    %31 = arith.cmpi eq, %15, %30 : vector<16x128xi32>
    %32 = arith.select %31, %14, %29 : vector<16x128xi1>, vector<16x128xf32>
    %c0_15 = arith.constant 0 : index
    %c0_16 = arith.constant 0 : index
    %33 = vector.load %arg6[%c0_15, %c0_16] : memref<16x128xf32, #tpu.memory_space<vmem>>, vector<16x128xf32>
    tpu.vector_store %arg6[%c0_15, %c0_16], %32 {strides = array<i32>} : memref<16x128xf32, #tpu.memory_space<vmem>>, vector<16x128xf32>,
    return
  }
  func.func @transform_0(%arg0: i32) -> (i32, i32) {
    %c0_i32 = arith.constant 0 : i32
    %c0_i32_0 = arith.constant 0 : i32
    return %arg0, %c0_i32 : i32, i32
  }
  func.func @transform_1(%arg0: i32) -> (i32, i32) {
    %c0_i32 = arith.constant 0 : i32
    %c0_i32_0 = arith.constant 0 : i32
    %c0_i32_1 = arith.constant 0 : i32
    return %c0_i32, %c0_i32_0 : i32, i32
  }
  func.func @transform_2(%arg0: i32) -> (i32, i32) {
    %c0_i32 = arith.constant 0 : i32
    %c0_i32_0 = arith.constant 0 : i32
    %c0_i32_1 = arith.constant 0 : i32
    return %c0_i32, %c0_i32_0 : i32, i32
  }
  func.func @transform_3(%arg0: i32) -> (i32, i32) {
    %c0_i32 = arith.constant 0 : i32
    %c0_i32_0 = arith.constant 0 : i32
    %c0_i32_1 = arith.constant 0 : i32
    return %c0_i32, %c0_i32_0 : i32, i32
  }
  func.func @transform_4(%arg0: i32) -> (i32, i32) {
    %c0_i32 = arith.constant 0 : i32
    %c0_i32_0 = arith.constant 0 : i32
    %c0_i32_1 = arith.constant 0 : i32
    return %c0_i32, %c0_i32_0 : i32, i32
  }
  func.func @transform_5(%arg0: i32) -> (i32, i32) {
    %c0_i32 = arith.constant 0 : i32
    %c0_i32_0 = arith.constant 0 : i32
    return %c0_i32, %arg0 : i32, i32
  }
}

</mosaic_0001>

<llo_original>
// kernel: _lambda_.1
$region0: #{_lambda_.1}
  #allocation0 [shape = 'u32[]', space=smem, size = 0x4, offset = 0x4, fixed_abs, tag = 'smem constant byte address 0x4 - core index']
  #allocation1 [shape = 'u32[144,128]{1,0:T(1,128)}', space=vmem, size = 0x12000, scoped, tag = 'internal scratch']
  %s0 = inlined_call_operand.vmem [shape: f32[128,32], index: 0, kind: input, shape index: {}]
  %s1 = inlined_call_operand.vmem [shape: bf16[32,256], index: 1, kind: input, shape index: {}]
  %s2 = inlined_call_operand.vmem [shape: f32[1,256], index: 2, kind: input, shape index: {}]
  %s3 = inlined_call_operand.vmem [shape: bf16[16,256], index: 3, kind: input, shape index: {}]
  %s4 = inlined_call_operand.vmem [shape: f32[16,1], index: 4, kind: input, shape index: {}]
  %s5 = inlined_call_operand.vmem [shape: f32[16,128], index: 5, kind: output, shape index: {}]
  %s6 = sld [smem:[#allocation0]]
  $region30: #{_lambda_.1} parent=0
    _
  %s8 = ssub.s32 1, %s6
  %s9 = scalar_select 0, %s8, %s6
  // Predicated region
  $region2: #{_lambda_.1} parent=0 // pred_check
    _
  $region3: #{_lambda_.1} parent=0 // pred_check_branch
    %11 = sbr.rel (0) target = $region5
  $region4: #{_lambda_.1} parent=0 // pred_region
    _
  $region5: #{_lambda_.1} parent=0 // pred_fallthru
    _
  // Predicated region
  $region6: #{_lambda_.1} parent=0 // pred_check
    _
  $region7: #{_lambda_.1} parent=0 // pred_check_branch
    %13 = sbr.rel (0) target = $region9
  $region8: #{_lambda_.1} parent=0 // pred_region
    _
  $region9: #{_lambda_.1} parent=0 // pred_fallthru
    _
  // Predicated region
  $region10: #{_lambda_.1} parent=0 // pred_check
    _
  $region11: #{_lambda_.1} parent=0 // pred_check_branch
    %15 = sbr.rel (0) target = $region13
  $region12: #{_lambda_.1} parent=0 // pred_region
    _
  $region13: #{_lambda_.1} parent=0 // pred_fallthru
    _
  // Predicated region
  $region14: #{_lambda_.1} parent=0 // pred_check
    _
  $region15: #{_lambda_.1} parent=0 // pred_check_branch
    %17 = sbr.rel (0) target = $region17
  $region16: #{_lambda_.1} parent=0 // pred_region
    _
  $region17: #{_lambda_.1} parent=0 // pred_fallthru
    _
  // Predicated region
  $region18: #{_lambda_.1} parent=0 // pred_check
    _
  $region19: #{_lambda_.1} parent=0 // pred_check_branch
    %19 = sbr.rel (0) target = $region21
  $region20: #{_lambda_.1} parent=0 // pred_region
    _
  $region21: #{_lambda_.1} parent=0 // pred_fallthru
    _
  %v21 = vld [vmem:[%s0] sm:$0xff]
  %v22 = vld [vmem:[%s0 + $0x8] sm:$0xff]
  %v23 = vld [vmem:[%s0 + $0x10] sm:$0xff]
  %v24 = vld [vmem:[%s0 + $0x18] sm:$0xff]
  %v25 = vld [vmem:[%s0 + $0x20] sm:$0xff]
  %v26 = vld [vmem:[%s0 + $0x28] sm:$0xff]
  %v27 = vld [vmem:[%s0 + $0x30] sm:$0xff]
  %v28 = vld [vmem:[%s0 + $0x38] sm:$0xff]
  %v29 = vld [vmem:[%s0 + $0x40] sm:$0xff]
  %v30 = vld [vmem:[%s0 + $0x48] sm:$0xff]
  %v31 = vld [vmem:[%s0 + $0x50] sm:$0xff]
  %v32 = vld [vmem:[%s0 + $0x58] sm:$0xff]
  %v33 = vld [vmem:[%s0 + $0x60] sm:$0xff]
  %v34 = vld [vmem:[%s0 + $0x68] sm:$0xff]
  %v35 = vld [vmem:[%s0 + $0x70] sm:$0xff]
  %v36 = vld [vmem:[%s0 + $0x78] sm:$0xff]
  %v37 = vpack.c.bf16 %v22, %v21
  %v38 = vpack.c.bf16 %v24, %v23
  %v39 = vpack.c.bf16 %v26, %v25
  %v40 = vpack.c.bf16 %v28, %v27
  %v41 = vpack.c.bf16 %v30, %v29
  %v42 = vpack.c.bf16 %v32, %v31
  %v43 = vpack.c.bf16 %v34, %v33
  %v44 = vpack.c.bf16 %v36, %v35
  %v45 = vld [vmem:[%s1] sm:$0xff]
  %v46 = vld [vmem:[%s1 + $0x8] sm:$0xff]
  %v47 = vld [vmem:[%s1 + $0x10] sm:$0xff]
  %v48 = vld [vmem:[%s1 + $0x18] sm:$0xff]
  %v49 = vld [vmem:[%s2] sm:$0x3]
  %v51 = vlaneseq
  %v52 = vshrl.u32 %v51, 7
  %v53 = vsub.s32 0, %v52
  %v54 = vrot.slane %v49, %v53
  %v55 = vlaneseq
  %v56 = vshrl.u32 %v55, 7
  %v57 = vsub.s32 1, %v56
  %v58 = vrot.slane %v49, %v57
  %v65 = vunpack.c.l.b16 %v45
  %v66 = vunpack.c.h.b16 %v45
  %v67 = vunpack.c.l.b16 %v46
  %v68 = vunpack.c.h.b16 %v46
  %v69 = vunpack.c.l.b16 %v47
  %v70 = vunpack.c.h.b16 %v47
  %v71 = vunpack.c.l.b16 %v48
  %v72 = vunpack.c.h.b16 %v48
  %v73 = vpack.c.b16 %v67, %v65
  %v74 = vpack.c.b16 %v68, %v66
  %v75 = vpack.c.b16 %v71, %v69
  %v76 = vpack.c.b16 %v72, %v70
  %vm81 = vcmask 261120
  %v83 = vsel %vm81, %v37, 0
  %v86 = vsel %vm81, %v38, 0
  %v89 = vsel %vm81, %v39, 0
  %v92 = vsel %vm81, %v40, 0
  %v95 = vsel %vm81, %v41, 0
  %v98 = vsel %vm81, %v42, 0
  %v101 = vsel %vm81, %v43, 0
  %v104 = vsel %vm81, %v44, 0
  %106 = vmatprep.subr.bf16.mxu0 %v74
  %107 = vmatpush1.bf16.msra.mxu0 %v73
  %108 = vmatprep.subr.bf16.mxu0 %v76
  %109 = vmatpush1.bf16.msra.mxu0 %v75
  %110 = vmatprep.subr.bf16.mxu0 0
  %111 = vmatpush1.bf16.msra.mxu0 0
  %112 = vmatprep.subr.bf16.mxu0 0
  %113 = vmatpush1.bf16.msra.mxu0 0
  %114 = vmatprep.subr.bf16.mxu0 0
  %115 = vmatpush1.bf16.msra.mxu0 0
  %116 = vmatprep.subr.bf16.mxu0 0
  %117 = vmatpush1.bf16.msra.mxu0 0
  %118 = vmatprep.subr.bf16.mxu0 0
  %119 = vmatpush1.bf16.msra.mxu0 0
  %120 = vmatprep.subr.bf16.mxu0 0
  %121 = vmatpush1.bf16.msra.mxu0 0
  %122 = vmatprep.subr.bf16.mxu0 0
  %123 = vmatpush1.bf16.msra.mxu0 0
  %124 = vmatprep.subr.bf16.mxu0 0
  %125 = vmatpush1.bf16.msra.mxu0 0
  %126 = vmatprep.subr.bf16.mxu0 0
  %127 = vmatpush1.bf16.msra.mxu0 0
  %128 = vmatprep.subr.bf16.mxu0 0
  %129 = vmatpush1.bf16.msra.mxu0 0
  %130 = vmatprep.subr.bf16.mxu0 0
  %131 = vmatpush1.bf16.msra.mxu0 0
  %132 = vmatprep.subr.bf16.mxu0 0
  %133 = vmatpush1.bf16.msra.mxu0 0
  %134 = vmatprep.subr.bf16.mxu0 0
  %135 = vmatpush1.bf16.msra.mxu0 0
  %136 = vmatprep.subr.bf16.mxu0 0
  %137 = vmatpush1.bf16.msra.mxu0 0
  %138 = vmatprep.mubr.bf16.mxu0 0
  %139 = vmatmul.mubr.bf16.gmra.mrb[0].mxu0 %v83
  %v140 = vpop.f32.mrb[0].mxu0
  %v141 = vadd.f32 %v54, %v140
  %v142 = vpop.f32.mrb[0].mxu0
  %v143 = vadd.f32 %v58, %v142
  %v144 = vpop.f32.mrb[0].mxu0
  %v145 = vadd.f32 %v54, %v144
  %v146 = vpop.f32.mrb[0].mxu0
  %v147 = vadd.f32 %v58, %v146
  %148 = vmatprep.mubr.bf16.mxu0 0
  %149 = vmatmul.mubr.bf16.gmra.mrb[0].mxu0 %v86
  %v150 = vpop.f32.mrb[0].mxu0
  %v151 = vadd.f32 %v54, %v150
  %v152 = vpop.f32.mrb[0].mxu0
  %v153 = vadd.f32 %v58, %v152
  %v154 = vpop.f32.mrb[0].mxu0
  %v155 = vadd.f32 %v54, %v154
  %v156 = vpop.f32.mrb[0].mxu0
  %v157 = vadd.f32 %v58, %v156
  %158 = vmatprep.mubr.bf16.mxu0 0
  %159 = vmatmul.mubr.bf16.gmra.mrb[0].mxu0 %v89
  %v160 = vpop.f32.mrb[0].mxu0
  %v161 = vadd.f32 %v54, %v160
  %v162 = vpop.f32.mrb[0].mxu0
  %v163 = vadd.f32 %v58, %v162
  %v164 = vpop.f32.mrb[0].mxu0
  %v165 = vadd.f32 %v54, %v164
  %v166 = vpop.f32.mrb[0].mxu0
  %v167 = vadd.f32 %v58, %v166
  %168 = vmatprep.mubr.bf16.mxu0 0
  %169 = vmatmul.mubr.bf16.gmra.mrb[0].mxu0 %v92
  %v170 = vpop.f32.mrb[0].mxu0
  %v171 = vadd.f32 %v54, %v170
  %v172 = vpop.f32.mrb[0].mxu0
  %v173 = vadd.f32 %v58, %v172
  %v174 = vpop.f32.mrb[0].mxu0
  %v175 = vadd.f32 %v54, %v174
  %v176 = vpop.f32.mrb[0].mxu0
  %v177 = vadd.f32 %v58, %v176
  %178 = vmatprep.mubr.bf16.mxu0 0
  %179 = vmatmul.mubr.bf16.gmra.mrb[0].mxu0 %v95
  %v180 = vpop.f32.mrb[0].mxu0
  %v181 = vadd.f32 %v54, %v180
  %v182 = vpop.f32.mrb[0].mxu0
  %v183 = vadd.f32 %v58, %v182
  %v184 = vpop.f32.mrb[0].mxu0
  %v185 = vadd.f32 %v54, %v184
  %v186 = vpop.f32.mrb[0].mxu0
  %v187 = vadd.f32 %v58, %v186
  %188 = vmatprep.mubr.bf16.mxu0 0
  %189 = vmatmul.mubr.bf16.gmra.mrb[0].mxu0 %v98
  %v190 = vpop.f32.mrb[0].mxu0
  %v191 = vadd.f32 %v54, %v190
  %v192 = vpop.f32.mrb[0].mxu0
  %v193 = vadd.f32 %v58, %v192
  %v194 = vpop.f32.mrb[0].mxu0
  %v195 = vadd.f32 %v54, %v194
  %v196 = vpop.f32.mrb[0].mxu0
  %v197 = vadd.f32 %v58, %v196
  %198 = vmatprep.mubr.bf16.mxu0 0
  %199 = vmatmul.mubr.bf16.gmra.mrb[0].mxu0 %v101
  %v200 = vpop.f32.mrb[0].mxu0
  %v201 = vadd.f32 %v54, %v200
  %v202 = vpop.f32.mrb[0].mxu0
  %v203 = vadd.f32 %v58, %v202
  %v204 = vpop.f32.mrb[0].mxu0
  %v205 = vadd.f32 %v54, %v204
  %v206 = vpop.f32.mrb[0].mxu0
  %v207 = vadd.f32 %v58, %v206
  %208 = vmatprep.mubr.bf16.mxu0 0
  %209 = vmatmul.mubr.bf16.gmra.mrb[0].mxu0 %v104
  %v210 = vpop.f32.mrb[0].mxu0
  %v211 = vadd.f32 %v54, %v210
  %v212 = vpop.f32.mrb[0].mxu0
  %v213 = vadd.f32 %v58, %v212
  %v214 = vpop.f32.mrb[0].mxu0
  %v215 = vadd.f32 %v54, %v214
  %v216 = vpop.f32.mrb[0].mxu0
  %v217 = vadd.f32 %v58, %v216
  %218 = vdwg.mxu0
  %v219 = vmax.f32 %v141, 0.0
  %v220 = vmax.f32 %v143, 0.0
  %v221 = vmax.f32 %v145, 0.0
  %v222 = vmax.f32 %v147, 0.0
  %v223 = vmax.f32 %v151, 0.0
  %v224 = vmax.f32 %v153, 0.0
  %v225 = vmax.f32 %v155, 0.0
  %v226 = vmax.f32 %v157, 0.0
  %v227 = vmax.f32 %v161, 0.0
  %v228 = vmax.f32 %v163, 0.0
  %v229 = vmax.f32 %v165, 0.0
  %v230 = vmax.f32 %v167, 0.0
  %v231 = vmax.f32 %v171, 0.0
  %v232 = vmax.f32 %v173, 0.0
  %v233 = vmax.f32 %v175, 0.0
  %v234 = vmax.f32 %v177, 0.0
  %v235 = vmax.f32 %v181, 0.0
  %v236 = vmax.f32 %v183, 0.0
  %v237 = vmax.f32 %v185, 0.0
  %v238 = vmax.f32 %v187, 0.0
  %v239 = vmax.f32 %v191, 0.0
  %v240 = vmax.f32 %v193, 0.0
  %v241 = vmax.f32 %v195, 0.0
  %v242 = vmax.f32 %v197, 0.0
  %v243 = vmax.f32 %v201, 0.0
  %v244 = vmax.f32 %v203, 0.0
  %v245 = vmax.f32 %v205, 0.0
  %v246 = vmax.f32 %v207, 0.0
  %v247 = vmax.f32 %v211, 0.0
  %v248 = vmax.f32 %v213, 0.0
  %v249 = vmax.f32 %v215, 0.0
  %v250 = vmax.f32 %v217, 0.0
  %v251 = vld [vmem:[%s3] sm:$0xff]
  %v252 = vld [vmem:[%s3 + $0x8] sm:$0xff]
  %v253 = vpack.c.bf16 %v221, %v219
  %v254 = vpack.c.bf16 %v222, %v220
  %v255 = vpack.c.bf16 %v225, %v223
  %v256 = vpack.c.bf16 %v226, %v224
  %v257 = vpack.c.bf16 %v229, %v227
  %v258 = vpack.c.bf16 %v230, %v228
  %v259 = vpack.c.bf16 %v233, %v231
  %v260 = vpack.c.bf16 %v234, %v232
  %v261 = vpack.c.bf16 %v237, %v235
  %v262 = vpack.c.bf16 %v238, %v236
  %v263 = vpack.c.bf16 %v241, %v239
  %v264 = vpack.c.bf16 %v242, %v240
  %v265 = vpack.c.bf16 %v245, %v243
  %v266 = vpack.c.bf16 %v246, %v244
  %v267 = vpack.c.bf16 %v249, %v247
  %v268 = vpack.c.bf16 %v250, %v248
  %v269 = vld [vmem:[%s4] sm:$0xff]
  %v270 = vld [vmem:[%s4 + $0x8] sm:$0xff]
  %272 = vset.pattern.permute.xlu0 0
  %273 = vperm.xlu0 %272, %v269
  %v274 = vpop.permute.xlu0 %273
  %277 = vset.pattern.permute.xlu0 0
  %278 = vperm.xlu0 %277, %v270
  %v279 = vpop.permute.xlu0 %278
  %v283 = vunpack.c.l.b16 %v251
  %v284 = vunpack.c.h.b16 %v251
  %v285 = vunpack.c.l.b16 %v252
  %v286 = vunpack.c.h.b16 %v252
  %v287 = vpack.c.b16 %v285, %v283
  %v288 = vpack.c.b16 %v286, %v284
  %291 = vmatprep.subr.bf16.mxu0 %v254
  %292 = vmatpush1.bf16.xpose.msra.mxu0 %v253
  %293 = vmatprep.subr.bf16.mxu0 %v256
  %294 = vmatpush1.bf16.xpose.msra.mxu0 %v255
  %295 = vmatprep.subr.bf16.mxu0 %v258
  %296 = vmatpush1.bf16.xpose.msra.mxu0 %v257
  %297 = vmatprep.subr.bf16.mxu0 %v260
  %298 = vmatpush1.bf16.xpose.msra.mxu0 %v259
  %299 = vmatprep.subr.bf16.mxu0 %v262
  %300 = vmatpush1.bf16.xpose.msra.mxu0 %v261
  %301 = vmatprep.subr.bf16.mxu0 %v264
  %302 = vmatpush1.bf16.xpose.msra.mxu0 %v263
  %303 = vmatprep.subr.bf16.mxu0 %v266
  %304 = vmatpush1.bf16.xpose.msra.mxu0 %v265
  %305 = vmatprep.subr.bf16.mxu0 %v268
  %306 = vmatpush1.bf16.xpose.msra.mxu0 %v267
  %307 = vmatprep.subr.bf16.mxu0 0
  %308 = vmatpush1.bf16.xpose.msra.mxu0 0
  %309 = vmatprep.subr.bf16.mxu0 0
  %310 = vmatpush1.bf16.xpose.msra.mxu0 0
  %311 = vmatprep.subr.bf16.mxu0 0
  %312 = vmatpush1.bf16.xpose.msra.mxu0 0
  %313 = vmatprep.subr.bf16.mxu0 0
  %314 = vmatpush1.bf16.xpose.msra.mxu0 0
  %315 = vmatprep.subr.bf16.mxu0 0
  %316 = vmatpush1.bf16.xpose.msra.mxu0 0
  %317 = vmatprep.subr.bf16.mxu0 0
  %318 = vmatpush1.bf16.xpose.msra.mxu0 0
  %319 = vmatprep.subr.bf16.mxu0 0
  %320 = vmatpush1.bf16.xpose.msra.mxu0 0
  %321 = vmatprep.subr.bf16.mxu0 0
  %322 = vmatpush1.bf16.xpose.msra.mxu0 0
  %323 = vmatprep.mubr.bf16.mxu0 %v288
  %324 = vmatmul.mubr.bf16.gmra.mrb[0].mxu0 %v287
  %v325 = vpop.f32.mrb[0].mxu0
  %v326 = vadd.f32 %v274, %v325
  %v327 = vpop.f32.mrb[0].mxu0
  %v328 = vpop.f32.mrb[0].mxu0
  %v329 = vadd.f32 %v279, %v328
  %v330 = vpop.f32.mrb[0].mxu0
  %331 = vdwg.mxu0
  %v332 = vlaneseq
  %v333 = vshrl.u32 %v332, 7
  %v334 = vadd.s32 %v333, 8
  %vm335 = vcmp.lt.s32.totalorder %v333, 8
  %vm336 = vcmp.lt.s32.totalorder %v334, 8
  %v337 = vsel %vm335, %v326, -1e+30
  %v338 = vsel %vm336, %v329, -1e+30
  %v339 = vmax.f32 %v337, %v338
  %v340 = vrot.slane %v339, 4
  %v341 = vmax.f32 %v339, %v340
  %v342 = vrot.slane %v341, 2
  %v343 = vmax.f32 %v341, %v342
  %v344 = vrot.slane %v343, 1
  %v345 = vmax.f32 %v343, %v344
  %v346 = vsub.f32 %v337, %v345
  %v347 = vsub.f32 %v338, %v345
  %v348 = vmul.f32 %v346, 1.442695
  %v349 = vpow.pop %v348
  %v350 = vmul.f32 %v347, 1.442695
  %v351 = vpow.pop %v350
  %v352 = vadd.f32 %v349, %v351
  %v353 = vrot.slane %v352, 4
  %v354 = vadd.f32 %v352, %v353
  %v355 = vrot.slane %v354, 2
  %v356 = vadd.f32 %v354, %v355
  %v357 = vrot.slane %v356, 1
  %v358 = vadd.f32 %v356, %v357
  %v359 = vrcp.pop %v358
  %v360 = vmul.f32 %v349, %v359
  %v361 = vmul.f32 %v351, %v359
  %vm362 = vcmp.eq.s32.totalorder %v333, 8
  %vm363 = vcmp.eq.s32.totalorder %v334, 8
  %v364 = vsel %vm362, %v326, %v360
  %v365 = vsel %vm363, %v329, %v361
  %366 = vst [vmem:[%s5] sm:$0xff] %v364
  %367 = vst [vmem:[%s5 + $0x8] sm:$0xff] %v365
  // Predicated region
  $region22: #{_lambda_.1} parent=0 // pred_check
    _
  $region23: #{_lambda_.1} parent=0 // pred_check_branch
    %369 = sbr.rel (0) target = $region25
  $region24: #{_lambda_.1} parent=0 // pred_region
    _
  $region25: #{_lambda_.1} parent=0 // pred_fallthru
    _
  // Predicated region
  $region26: #{_lambda_.1} parent=0 // pred_check
    _
  $region27: #{_lambda_.1} parent=0 // pred_check_branch
    %371 = sbr.rel (0) target = $region29
  $region28: #{_lambda_.1} parent=0 // pred_region
    _
  $region29: #{_lambda_.1} parent=0 // pred_fallthru
    _

</llo_original>
